<compile_context>
chip_gen: v5e
topology: v5e:2x2
jax: 0.10.0
libtpu: 0.0.40
codegen_flags: <defaults>
</compile_context>

<pallas_src>
import jax
import jax.numpy as jnp
from jax.experimental import pallas as pl
from jax.experimental.pallas import tpu as pltpu

NUM_CLASSES = 20      # fc1 out_features
IN_FEATURES = 784     # 1 * 28 * 28
N_PAD = 128           # lane-dense padded class axis
NEG_LARGE = -1e30     # additive mask value for padded class lanes


def _cdiv(a, b):
    return (a + b - 1) // b


def _round_up(x, m):
    return ((x + m - 1) // m) * m


def _fcnet_kernel(x_ref, w1_ref, b1_ref, mask_ref, o_ref):
    """Fused fc1 + ReLU + (eval) dropout + log_softmax on one batch tile.

    x_ref   : (TB, 784)   f32  (cast to bf16 in-kernel for the MXU)
    w1_ref  : (784, 128)  bf16 (transposed + zero-padded PyTorch weight, resident)
    b1_ref  : (1, 128)    f32  (zero-padded bias, resident)
    mask_ref: (1, 128)    f32  (0 for real classes, -1e30 for padded lanes)
    o_ref   : (TB, 128)   f32  (only [:, :20] is meaningful)
    """
    # fc1: bf16 MXU matmul with f32 accumulation, bias broadcast over batch.
    x_bf16 = x_ref[...].astype(jnp.bfloat16)
    h = jnp.dot(x_bf16, w1_ref[...],
                preferred_element_type=jnp.float32) + b1_ref[...]
    # ReLU.
    h = jnp.maximum(h, 0.0)
    # dropout(p=0.5): eval-mode identity.
    # TODO(synk): training-mode dropout would use pltpu.prng_seed/prng_random_bits.
    # Second F.relu in the reference is a no-op after the first ReLU (elided).

    # Knock the 108 padded class lanes out of the softmax normalizer.
    h = h + mask_ref[...]

    # Numerically stable log_softmax along the class axis.
    m = jnp.max(h, axis=1, keepdims=True)
    shifted = h - m
    lse = jnp.log(jnp.sum(jnp.exp(shifted), axis=1, keepdims=True))
    o_ref[...] = (shifted - lse).astype(o_ref.dtype)


def prepare_params(w1, b1):
    """One-time param prep: transpose + pad N->128, cast weight to bf16,
    and build the resident additive class mask.

    w1: (20, 784) PyTorch layout, f32.  b1: (20,), f32.
    Returns (w1_t_pad_bf16 (784,128), b1_pad (1,128) f32, mask_pad (1,128) f32).
    """
    w1_t_pad = jnp.zeros((IN_FEATURES, N_PAD), jnp.float32)
    w1_t_pad = w1_t_pad.at[:, :NUM_CLASSES].set(w1.T)
    b1_pad = jnp.zeros((1, N_PAD), jnp.float32)
    b1_pad = b1_pad.at[0, :NUM_CLASSES].set(b1)
    mask_pad = jnp.full((1, N_PAD), NEG_LARGE, jnp.float32)
    mask_pad = mask_pad.at[0, :NUM_CLASSES].set(0.0)
    return w1_t_pad.astype(jnp.bfloat16), b1_pad, mask_pad


def _choose_tile(B, tile_b):
    """Adaptive batch tile: bounds padding waste to <16 rows and guarantees
    >=2 grid steps for large single-tile batches (v7x megacore sharding)."""
    n_tiles = max(1, _cdiv(B, tile_b))
    if n_tiles == 1 and B >= 1024:
        n_tiles = 2
    tb = _round_up(_cdiv(B, n_tiles), 16)
    return tb, n_tiles


def fcnet_forward(x_nchw, w1_t_pad_bf16, b1_pad, mask_pad, *, tile_b=2048):
    """x_nchw: (B, 1, 28, 28) f32. Returns (B, 20) f32 log-probabilities."""
    B = x_nchw.shape[0]
    x_flat = x_nchw.reshape(B, -1)          # (B, 784) f32, reshape only (no copy/cast)

    tb, n_tiles = _choose_tile(B, tile_b)
    b_padded = tb * n_tiles
    if b_padded != B:                        # pad only when B is ragged
        x_flat = jnp.pad(x_flat, ((0, b_padded - B), (0, 0)))

    out_padded = pl.pallas_call(
        _fcnet_kernel,
        out_shape=jax.ShapeDtypeStruct((b_padded, N_PAD), jnp.float32),
        grid=(n_tiles,),
        in_specs=[
            pl.BlockSpec((tb, IN_FEATURES), lambda i: (i, 0)),      # x tile (f32)
            pl.BlockSpec((IN_FEATURES, N_PAD), lambda i: (0, 0)),   # weight (resident)
            pl.BlockSpec((1, N_PAD), lambda i: (0, 0)),             # bias (resident)
            pl.BlockSpec((1, N_PAD), lambda i: (0, 0)),             # class mask (resident)
        ],
        out_specs=pl.BlockSpec((tb, N_PAD), lambda i: (i, 0)),
        compiler_params=pltpu.CompilerParams(
            dimension_semantics=("parallel",),
            vmem_limit_bytes=32 * 1024 * 1024,   # double-buffered f32 x tile @ tb=2048
        ),
    )(x_flat, w1_t_pad_bf16, b1_pad, mask_pad)

    return out_padded[:B, :NUM_CLASSES]


def _init_params(key):
    """Deterministic init mimicking nn.Linear's uniform(-1/sqrt(fan_in)) ranges."""
    k1, k2, k3, k4 = jax.random.split(key, 4)
    bound1 = 1.0 / jnp.sqrt(784.0)
    w1 = jax.random.uniform(k1, (20, 784), jnp.float32, -bound1, bound1)
    b1 = jax.random.uniform(k2, (20,), jnp.float32, -bound1, bound1)
    # fc2 params exist in the module but are unused in forward(); kept for parity.
    bound2 = 1.0 / jnp.sqrt(20.0)
    w2 = jax.random.uniform(k3, (10, 20), jnp.float32, -bound2, bound2)
    b2 = jax.random.uniform(k4, (10,), jnp.float32, -bound2, bound2)
    return w1, b1, w2, b2


if __name__ == "__main__":
    key = jax.random.PRNGKey(0)
    pkey, xkey = jax.random.split(key)
    w1, b1, _w2, _b2 = _init_params(pkey)
    w1_t_pad_bf16, b1_pad, mask_pad = prepare_params(w1, b1)

    # Small MNIST-like input batch: (B=2, C=1, H=28, W=28) -> 784 features.
    B = 2
    x = jax.random.normal(xkey, (B, 1, 28, 28), jnp.float32)

    out = fcnet_forward(x, w1_t_pad_bf16, b1_pad, mask_pad)
    jax.block_until_ready(out)

    # Plain-JAX f32 reference (eval-mode dropout = identity). Tolerance is
    # loosened slightly because the kernel feeds bf16 operands to the MXU.
    h = jnp.maximum(x.reshape(B, -1) @ w1.T + b1, 0.0)
    ref = jax.nn.log_softmax(jnp.maximum(h, 0.0), axis=1)

    assert out.shape == (B, NUM_CLASSES)
    assert bool(jnp.all(jnp.isfinite(out)))
    assert jnp.allclose(out, ref, atol=3e-2, rtol=3e-2)

    print("KERNEL_OK")
</pallas_src>

<mosaic_0001>
module attributes {stable_mosaic.version = 11 : i64} {
  func.func @_fcnet_kernel(%arg0: i32, %arg1: memref<16x784xf32, #tpu.memory_space<vmem>>, %arg2: memref<784x128xbf16, #tpu.memory_space<vmem>>, %arg3: memref<1x128xf32, #tpu.memory_space<vmem>>, %arg4: memref<1x128xf32, #tpu.memory_space<vmem>>, %arg5: memref<16x128xf32, #tpu.memory_space<vmem>>) attributes {dimension_semantics = [#tpu.dimension_semantics<parallel>], iteration_bounds = array<i64: 1>, scalar_prefetch = 0 : i64, scratch_operands = 0 : i64, tpu.core_type = #tpu.core_type<tc>, window_params = [{transform_indices = @transform_0, window_bounds = array<i64: 16, 784>}, {pipeline_mode = #tpu.pipeline_mode<synchronous>, transform_indices = @transform_1, window_bounds = array<i64: 784, 128>}, {pipeline_mode = #tpu.pipeline_mode<synchronous>, transform_indices = @transform_2, window_bounds = array<i64: 1, 128>}, {pipeline_mode = #tpu.pipeline_mode<synchronous>, transform_indices = @transform_3, window_bounds = array<i64: 1, 128>}, {transform_indices = @transform_4, window_bounds = array<i64: 16, 128>}]} {
    %c0 = arith.constant 0 : index
    %c0_0 = arith.constant 0 : index
    %0 = vector.load %arg1[%c0, %c0_0] : memref<16x784xf32, #tpu.memory_space<vmem>>, vector<16x784xf32>
    %1 = arith.truncf %0 : vector<16x784xf32> to vector<16x784xbf16>
    %c0_1 = arith.constant 0 : index
    %c0_2 = arith.constant 0 : index
    %2 = vector.load %arg2[%c0_1, %c0_2] : memref<784x128xbf16, #tpu.memory_space<vmem>>, vector<784x128xbf16>
    %cst = arith.constant dense<0.000000e+00> : vector<16x128xf32>
    %3 = tpu.matmul %1, %2, %cst {dimension_numbers = #tpu.dot_dimension_numbers<[1], [0], [0], [1], [0, 0, 1, 1], [], []>} : vector<16x784xbf16>, vector<784x128xbf16>, vector<16x128xf32> -> vector<16x128xf32>
    %c0_3 = arith.constant 0 : index
    %c0_4 = arith.constant 0 : index
    %4 = vector.load %arg3[%c0_3, %c0_4] : memref<1x128xf32, #tpu.memory_space<vmem>>, vector<1x128xf32>
    %5 = vector.broadcast %4 : vector<1x128xf32> to vector<16x128xf32>
    %6 = arith.addf %3, %5 : vector<16x128xf32>
    %cst_5 = arith.constant 0.000000e+00 : f32
    %7 = vector.broadcast %cst_5 : f32 to vector<16x128xf32>
    %8 = arith.maximumf %6, %7 : vector<16x128xf32>
    %c0_6 = arith.constant 0 : index
    %c0_7 = arith.constant 0 : index
    %9 = vector.load %arg4[%c0_6, %c0_7] : memref<1x128xf32, #tpu.memory_space<vmem>>, vector<1x128xf32>
    %10 = vector.broadcast %9 : vector<1x128xf32> to vector<16x128xf32>
    %11 = arith.addf %8, %10 : vector<16x128xf32>
    %cst_8 = arith.constant dense<0xFF800000> : vector<16xf32>
    %12 = vector.multi_reduction <maximumf>, %11, %cst_8 [1] : vector<16x128xf32> to vector<16xf32>
    %13 = vector.shape_cast %12 : vector<16xf32> to vector<16x1xf32>
    %14 = vector.broadcast %13 : vector<16x1xf32> to vector<16x128xf32>
    %15 = arith.subf %11, %14 : vector<16x128xf32>
    %16 = math.exp %15 : vector<16x128xf32>
    %cst_9 = arith.constant dense<0.000000e+00> : vector<16xf32>
    %17 = vector.multi_reduction <add>, %16, %cst_9 [1] : vector<16x128xf32> to vector<16xf32>
    %18 = vector.shape_cast %17 : vector<16xf32> to vector<16x1xf32>
    %19 = math.log %18 : vector<16x1xf32>
    %20 = vector.broadcast %19 : vector<16x1xf32> to vector<16x128xf32>
    %21 = arith.subf %15, %20 : vector<16x128xf32>
    %c0_10 = arith.constant 0 : index
    %c0_11 = arith.constant 0 : index
    %22 = vector.load %arg5[%c0_10, %c0_11] : memref<16x128xf32, #tpu.memory_space<vmem>>, vector<16x128xf32>
    tpu.vector_store %arg5[%c0_10, %c0_11], %21 {strides = array<i32>} : memref<16x128xf32, #tpu.memory_space<vmem>>, vector<16x128xf32>,
    return
  }
  func.func @transform_0(%arg0: i32) -> (i32, i32) {
    %c0_i32 = arith.constant 0 : i32
    %c0_i32_0 = arith.constant 0 : i32
    return %arg0, %c0_i32 : i32, i32
  }
  func.func @transform_1(%arg0: i32) -> (i32, i32) {
    %c0_i32 = arith.constant 0 : i32
    %c0_i32_0 = arith.constant 0 : i32
    %c0_i32_1 = arith.constant 0 : i32
    return %c0_i32, %c0_i32_0 : i32, i32
  }
  func.func @transform_2(%arg0: i32) -> (i32, i32) {
    %c0_i32 = arith.constant 0 : i32
    %c0_i32_0 = arith.constant 0 : i32
    %c0_i32_1 = arith.constant 0 : i32
    return %c0_i32, %c0_i32_0 : i32, i32
  }
  func.func @transform_3(%arg0: i32) -> (i32, i32) {
    %c0_i32 = arith.constant 0 : i32
    %c0_i32_0 = arith.constant 0 : i32
    %c0_i32_1 = arith.constant 0 : i32
    return %c0_i32, %c0_i32_0 : i32, i32
  }
  func.func @transform_4(%arg0: i32) -> (i32, i32) {
    %c0_i32 = arith.constant 0 : i32
    %c0_i32_0 = arith.constant 0 : i32
    return %arg0, %c0_i32 : i32, i32
  }
}

</mosaic_0001>

<llo_original>
// kernel: tpu_custom_call.1
$region0: #{tpu_custom_call.1}
  #allocation0 [shape = 'u32[]', space=smem, size = 0x4, offset = 0x4, fixed_abs, tag = 'smem constant byte address 0x4 - core index']
  #allocation1 [shape = 'u32[72,128]{1,0:T(1,128)}', space=vmem, size = 0x9000, scoped, tag = 'internal scratch']
  %s0 = inlined_call_operand.hbm [shape: f32[16,784], index: 0, kind: input, shape index: {}]
  %s1 = inlined_call_operand.hbm [shape: bf16[784,128], index: 1, kind: input, shape index: {}]
  %s2 = inlined_call_operand.vmem [shape: f32[1,128], index: 2, kind: input, shape index: {}]
  %s3 = inlined_call_operand.vmem [shape: f32[1,128], index: 3, kind: input, shape index: {}]
  %s4 = inlined_call_operand.hbm [shape: f32[16,128], index: 4, kind: output, shape index: {}]
  %s5 = sld [smem:[#allocation0]]
  $region34: #{tpu_custom_call.1} parent=0
    _
  %s7 = ssub.s32 1, %s5
  %s8 = scalar_select 0, %s7, %s5
  $region1: #{tpu_custom_call.1} parent=0
    #allocation2 [shape = 'u8[57344]{0}', space=vmem, size = 0xe000, scoped, tag = 'input window, operand 0, single buffered']
    #allocation3 [shape = 's32[1]{0}', space=sflag, size = 0x4, scoped, tag = 'scoped memory for tpu_custom_call.1']
    #allocation4 [shape = 's32[1]{0}', space=sflag, size = 0x4, scoped, tag = 'scoped memory for tpu_custom_call.1']
    #allocation5 [shape = 'u8[200704]{0}', space=vmem, size = 0x31000, scoped, tag = 'input window, operand 1, single buffered']
    #allocation6 [shape = 's32[1]{0}', space=sflag, size = 0x4, scoped, tag = 'scoped memory for tpu_custom_call.1']
    #allocation7 [shape = 'u8[8192]{0}', space=vmem, size = 0x2000, scoped, tag = 'output window, operand 0, single buffered']
    %9 = vsyncpa [#allocation3], 0
    %10 = vsyncpa [#allocation6], 0
    %11 = vsyncpa [#allocation4], 0
    // Predicated region
    $region2: #{tpu_custom_call.1} parent=1 // pred_check
      _
    $region3: #{tpu_custom_call.1} parent=1 // pred_check_branch
      %13 = sbr.rel (0) target = $region5
    $region4: #{tpu_custom_call.1} parent=1 // pred_region
      %15 = vsyncadd [#allocation3], 0
      %s16 = sshll.u32 %s0, 4
      %s17 = int_to_ptr.hbm [resolvable:$true] %s16
      %s18 = sshll.u32 [#allocation2], 4
      %s19 = int_to_ptr.vmem [resolvable:$true] %s18
      %24 = dma.hbm_to_vmem [thread:$0]  %s17, 1792, %s19, [#allocation3], 896, 896, 56
    $region5: #{tpu_custom_call.1} parent=1 // pred_fallthru
      _
    // Predicated region
    $region6: #{tpu_custom_call.1} parent=1 // pred_check
      _
    $region7: #{tpu_custom_call.1} parent=1 // pred_check_branch
      %26 = sbr.rel (0) target = $region9
    $region8: #{tpu_custom_call.1} parent=1 // pred_region
      %28 = vsyncadd [#allocation6], 0
      %s29 = sshll.u32 %s1, 4
      %s30 = int_to_ptr.hbm [resolvable:$true] %s29
      %s31 = sshll.u32 [#allocation5], 4
      %s32 = int_to_ptr.vmem [resolvable:$true] %s31
      %37 = dma.hbm_to_vmem [thread:$0]  %s30, 6272, %s32, [#allocation6], 64, 64, 4
    $region9: #{tpu_custom_call.1} parent=1 // pred_fallthru
      _
    // Predicated region
    $region10: #{tpu_custom_call.1} parent=1 // pred_check
      _
    $region11: #{tpu_custom_call.1} parent=1 // pred_check_branch
      %39 = sbr.rel (0) target = $region13
    $region12: #{tpu_custom_call.1} parent=1 // pred_region
      _
    $region13: #{tpu_custom_call.1} parent=1 // pred_fallthru
      _
    // Predicated region
    $region14: #{tpu_custom_call.1} parent=1 // pred_check
      _
    $region15: #{tpu_custom_call.1} parent=1 // pred_check_branch
      %41 = sbr.rel (0) target = $region17
    $region16: #{tpu_custom_call.1} parent=1 // pred_region
      _
    $region17: #{tpu_custom_call.1} parent=1 // pred_fallthru
      _
    // Predicated region
    $region18: #{tpu_custom_call.1} parent=1 // pred_check
      _
    $region19: #{tpu_custom_call.1} parent=1 // pred_check_branch
      %43 = sbr.rel (0) target = $region21
    $region20: #{tpu_custom_call.1} parent=1 // pred_region
      %45 = dma.done [#allocation3], 1792
    $region21: #{tpu_custom_call.1} parent=1 // pred_fallthru
      _
    // Predicated region
    $region22: #{tpu_custom_call.1} parent=1 // pred_check
      _
    $region23: #{tpu_custom_call.1} parent=1 // pred_check_branch
      %47 = sbr.rel (0) target = $region25
    $region24: #{tpu_custom_call.1} parent=1 // pred_region
      %49 = dma.done [#allocation6], 6272
    $region25: #{tpu_custom_call.1} parent=1 // pred_fallthru
      _
    %v51 = vld [vmem:[#allocation2] sm:$0xff]
    %v52 = vld [vmem:[#allocation2 + $0x8] sm:$0xff]
    %v53 = vld [vmem:[#allocation2 + $0x10] sm:$0xff]
    %v54 = vld [vmem:[#allocation2 + $0x18] sm:$0xff]
    %v55 = vld [vmem:[#allocation2 + $0x20] sm:$0xff]
    %v56 = vld [vmem:[#allocation2 + $0x28] sm:$0xff]
    %v57 = vld [vmem:[#allocation2 + $0x30] sm:$0xff]
    %v58 = vld [vmem:[#allocation2 + $0x38] sm:$0xff]
    %v59 = vld [vmem:[#allocation2 + $0x40] sm:$0xff]
    %v60 = vld [vmem:[#allocation2 + $0x48] sm:$0xff]
    %v61 = vld [vmem:[#allocation2 + $0x50] sm:$0xff]
    %v62 = vld [vmem:[#allocation2 + $0x58] sm:$0xff]
    %v63 = vld [vmem:[#allocation2 + $0x60] sm:$0xff]
    %v64 = vld [vmem:[#allocation2 + $0x68] sm:$0xff]
    %v65 = vpack.c.bf16 %v58, %v51
    %v66 = vpack.c.bf16 %v59, %v52
    %v67 = vpack.c.bf16 %v60, %v53
    %v68 = vpack.c.bf16 %v61, %v54
    %v69 = vpack.c.bf16 %v62, %v55
    %v70 = vpack.c.bf16 %v63, %v56
    %v71 = vpack.c.bf16 %v64, %v57
    %v72 = vld [vmem:[#allocation5] sm:$0xf]
    %v73 = vld [vmem:[#allocation5 + $0x4] sm:$0xf]
    %v74 = vld [vmem:[#allocation5 + $0x8] sm:$0xf]
    %v75 = vld [vmem:[#allocation5 + $0xc] sm:$0xf]
    %v76 = vld [vmem:[#allocation5 + $0x10] sm:$0xf]
    %v77 = vld [vmem:[#allocation5 + $0x14] sm:$0xf]
    %v78 = vld [vmem:[#allocation5 + $0x18] sm:$0xf]
    %v79 = vld [vmem:[#allocation5 + $0x1c] sm:$0xf]
    %v80 = vld [vmem:[#allocation5 + $0x20] sm:$0xf]
    %v81 = vld [vmem:[#allocation5 + $0x24] sm:$0xf]
    %v82 = vld [vmem:[#allocation5 + $0x28] sm:$0xf]
    %v83 = vld [vmem:[#allocation5 + $0x2c] sm:$0xf]
    %v84 = vld [vmem:[#allocation5 + $0x30] sm:$0xf]
    %v85 = vld [vmem:[#allocation5 + $0x34] sm:$0xf]
    %v86 = vld [vmem:[#allocation5 + $0x38] sm:$0xf]
    %v87 = vld [vmem:[#allocation5 + $0x3c] sm:$0xf]
    %v88 = vld [vmem:[#allocation5 + $0x40] sm:$0xf]
    %v89 = vld [vmem:[#allocation5 + $0x44] sm:$0xf]
    %v90 = vld [vmem:[#allocation5 + $0x48] sm:$0xf]
    %v91 = vld [vmem:[#allocation5 + $0x4c] sm:$0xf]
    %v92 = vld [vmem:[#allocation5 + $0x50] sm:$0xf]
    %v93 = vld [vmem:[#allocation5 + $0x54] sm:$0xf]
    %v94 = vld [vmem:[#allocation5 + $0x58] sm:$0xf]
    %v95 = vld [vmem:[#allocation5 + $0x5c] sm:$0xf]
    %v96 = vld [vmem:[#allocation5 + $0x60] sm:$0xf]
    %v97 = vld [vmem:[#allocation5 + $0x64] sm:$0xf]
    %v98 = vld [vmem:[#allocation5 + $0x68] sm:$0xf]
    %v99 = vld [vmem:[#allocation5 + $0x6c] sm:$0xf]
    %v100 = vld [vmem:[#allocation5 + $0x70] sm:$0xf]
    %v101 = vld [vmem:[#allocation5 + $0x74] sm:$0xf]
    %v102 = vld [vmem:[#allocation5 + $0x78] sm:$0xf]
    %v103 = vld [vmem:[#allocation5 + $0x7c] sm:$0xf]
    %v104 = vld [vmem:[#allocation5 + $0x80] sm:$0xf]
    %v105 = vld [vmem:[#allocation5 + $0x84] sm:$0xf]
    %v106 = vld [vmem:[#allocation5 + $0x88] sm:$0xf]
    %v107 = vld [vmem:[#allocation5 + $0x8c] sm:$0xf]
    %v108 = vld [vmem:[#allocation5 + $0x90] sm:$0xf]
    %v109 = vld [vmem:[#allocation5 + $0x94] sm:$0xf]
    %v110 = vld [vmem:[#allocation5 + $0x98] sm:$0xf]
    %v111 = vld [vmem:[#allocation5 + $0x9c] sm:$0xf]
    %v112 = vld [vmem:[#allocation5 + $0xa0] sm:$0xf]
    %v113 = vld [vmem:[#allocation5 + $0xa4] sm:$0xf]
    %v114 = vld [vmem:[#allocation5 + $0xa8] sm:$0xf]
    %v115 = vld [vmem:[#allocation5 + $0xac] sm:$0xf]
    %v116 = vld [vmem:[#allocation5 + $0xb0] sm:$0xf]
    %v117 = vld [vmem:[#allocation5 + $0xb4] sm:$0xf]
    %v118 = vld [vmem:[#allocation5 + $0xb8] sm:$0xf]
    %v119 = vld [vmem:[#allocation5 + $0xbc] sm:$0xf]
    %v120 = vld [vmem:[#allocation5 + $0xc0] sm:$0xf]
    %v121 = vld [vmem:[#allocation5 + $0xc4] sm:$0xf]
    %v122 = vld [vmem:[#allocation5 + $0xc8] sm:$0xf]
    %v123 = vld [vmem:[#allocation5 + $0xcc] sm:$0xf]
    %v124 = vld [vmem:[#allocation5 + $0xd0] sm:$0xf]
    %v125 = vld [vmem:[#allocation5 + $0xd4] sm:$0xf]
    %v126 = vld [vmem:[#allocation5 + $0xd8] sm:$0xf]
    %v127 = vld [vmem:[#allocation5 + $0xdc] sm:$0xf]
    %v128 = vld [vmem:[#allocation5 + $0xe0] sm:$0xf]
    %v129 = vld [vmem:[#allocation5 + $0xe4] sm:$0xf]
    %v130 = vld [vmem:[#allocation5 + $0xe8] sm:$0xf]
    %v131 = vld [vmem:[#allocation5 + $0xec] sm:$0xf]
    %v132 = vld [vmem:[#allocation5 + $0xf0] sm:$0xf]
    %v133 = vld [vmem:[#allocation5 + $0xf4] sm:$0xf]
    %v134 = vld [vmem:[#allocation5 + $0xf8] sm:$0xf]
    %v135 = vld [vmem:[#allocation5 + $0xfc] sm:$0xf]
    %v136 = vld [vmem:[#allocation5 + $0x100] sm:$0xf]
    %v137 = vld [vmem:[#allocation5 + $0x104] sm:$0xf]
    %v138 = vld [vmem:[#allocation5 + $0x108] sm:$0xf]
    %v139 = vld [vmem:[#allocation5 + $0x10c] sm:$0xf]
    %v140 = vld [vmem:[#allocation5 + $0x110] sm:$0xf]
    %v141 = vld [vmem:[#allocation5 + $0x114] sm:$0xf]
    %v142 = vld [vmem:[#allocation5 + $0x118] sm:$0xf]
    %v143 = vld [vmem:[#allocation5 + $0x11c] sm:$0xf]
    %v144 = vld [vmem:[#allocation5 + $0x120] sm:$0xf]
    %v145 = vld [vmem:[#allocation5 + $0x124] sm:$0xf]
    %v146 = vld [vmem:[#allocation5 + $0x128] sm:$0xf]
    %v147 = vld [vmem:[#allocation5 + $0x12c] sm:$0xf]
    %v148 = vld [vmem:[#allocation5 + $0x130] sm:$0xf]
    %v149 = vld [vmem:[#allocation5 + $0x134] sm:$0xf]
    %v150 = vld [vmem:[#allocation5 + $0x138] sm:$0xf]
    %v151 = vld [vmem:[#allocation5 + $0x13c] sm:$0xf]
    %v152 = vld [vmem:[#allocation5 + $0x140] sm:$0xf]
    %v153 = vld [vmem:[#allocation5 + $0x144] sm:$0xf]
    %v154 = vld [vmem:[#allocation5 + $0x148] sm:$0xf]
    %v155 = vld [vmem:[#allocation5 + $0x14c] sm:$0xf]
    %v156 = vld [vmem:[#allocation5 + $0x150] sm:$0xf]
    %v157 = vld [vmem:[#allocation5 + $0x154] sm:$0xf]
    %v158 = vld [vmem:[#allocation5 + $0x158] sm:$0xf]
    %v159 = vld [vmem:[#allocation5 + $0x15c] sm:$0xf]
    %v160 = vld [vmem:[#allocation5 + $0x160] sm:$0xf]
    %v161 = vld [vmem:[#allocation5 + $0x164] sm:$0xf]
    %v162 = vld [vmem:[#allocation5 + $0x168] sm:$0xf]
    %v163 = vld [vmem:[#allocation5 + $0x16c] sm:$0xf]
    %v164 = vld [vmem:[#allocation5 + $0x170] sm:$0xf]
    %v165 = vld [vmem:[#allocation5 + $0x174] sm:$0xf]
    %v166 = vld [vmem:[#allocation5 + $0x178] sm:$0xf]
    %v167 = vld [vmem:[#allocation5 + $0x17c] sm:$0xf]
    %v168 = vld [vmem:[#allocation5 + $0x180] sm:$0xf]
    %v169 = vld [vmem:[#allocation5 + $0x184] sm:$0xf]
    %v170 = vld [vmem:[%s2] sm:$0x1]
    %v172 = vperm.slane %v170, 0
    %v272 = vunpack.c.l.b16 %v72
    %v273 = vunpack.c.l.b16 %v73
    %v274 = vunpack.c.l.b16 %v74
    %v275 = vunpack.c.l.b16 %v75
    %v276 = vunpack.c.l.b16 %v76
    %v277 = vunpack.c.l.b16 %v77
    %v278 = vunpack.c.l.b16 %v78
    %v279 = vunpack.c.l.b16 %v79
    %v280 = vunpack.c.l.b16 %v80
    %v281 = vunpack.c.l.b16 %v81
    %v282 = vunpack.c.l.b16 %v82
    %v283 = vunpack.c.l.b16 %v83
    %v284 = vunpack.c.l.b16 %v84
    %v285 = vunpack.c.l.b16 %v85
    %v286 = vunpack.c.l.b16 %v86
    %v287 = vunpack.c.l.b16 %v87
    %v288 = vunpack.c.l.b16 %v88
    %v289 = vunpack.c.l.b16 %v89
    %v290 = vunpack.c.l.b16 %v90
    %v291 = vunpack.c.l.b16 %v91
    %v292 = vunpack.c.l.b16 %v92
    %v293 = vunpack.c.l.b16 %v93
    %v294 = vunpack.c.l.b16 %v94
    %v295 = vunpack.c.l.b16 %v95
    %v296 = vunpack.c.l.b16 %v96
    %v297 = vunpack.c.l.b16 %v97
    %v298 = vunpack.c.l.b16 %v98
    %v299 = vunpack.c.l.b16 %v99
    %v300 = vunpack.c.l.b16 %v100
    %v301 = vunpack.c.l.b16 %v101
    %v302 = vunpack.c.l.b16 %v102
    %v303 = vunpack.c.l.b16 %v103
    %v304 = vunpack.c.l.b16 %v104
    %v305 = vunpack.c.l.b16 %v105
    %v306 = vunpack.c.l.b16 %v106
    %v307 = vunpack.c.l.b16 %v107
    %v308 = vunpack.c.l.b16 %v108
    %v309 = vunpack.c.l.b16 %v109
    %v310 = vunpack.c.l.b16 %v110
    %v311 = vunpack.c.l.b16 %v111
    %v312 = vunpack.c.l.b16 %v112
    %v313 = vunpack.c.l.b16 %v113
    %v314 = vunpack.c.l.b16 %v114
    %v315 = vunpack.c.l.b16 %v115
    %v316 = vunpack.c.l.b16 %v116
    %v317 = vunpack.c.l.b16 %v117
    %v318 = vunpack.c.l.b16 %v118
    %v319 = vunpack.c.l.b16 %v119
    %v320 = vunpack.c.l.b16 %v120
    %v321 = vunpack.c.l.b16 %v121
    %v322 = vunpack.c.l.b16 %v122
    %v323 = vunpack.c.l.b16 %v123
    %v324 = vunpack.c.l.b16 %v124
    %v325 = vunpack.c.l.b16 %v125
    %v326 = vunpack.c.l.b16 %v126
    %v327 = vunpack.c.l.b16 %v127
    %v328 = vunpack.c.l.b16 %v128
    %v329 = vunpack.c.l.b16 %v129
    %v330 = vunpack.c.l.b16 %v130
    %v331 = vunpack.c.l.b16 %v131
    %v332 = vunpack.c.l.b16 %v132
    %v333 = vunpack.c.l.b16 %v133
    %v334 = vunpack.c.l.b16 %v134
    %v335 = vunpack.c.l.b16 %v135
    %v336 = vunpack.c.l.b16 %v136
    %v337 = vunpack.c.l.b16 %v137
    %v338 = vunpack.c.l.b16 %v138
    %v339 = vunpack.c.l.b16 %v139
    %v340 = vunpack.c.l.b16 %v140
    %v341 = vunpack.c.l.b16 %v141
    %v342 = vunpack.c.l.b16 %v142
    %v343 = vunpack.c.l.b16 %v143
    %v344 = vunpack.c.l.b16 %v144
    %v345 = vunpack.c.l.b16 %v145
    %v346 = vunpack.c.l.b16 %v146
    %v347 = vunpack.c.l.b16 %v147
    %v348 = vunpack.c.l.b16 %v148
    %v349 = vunpack.c.l.b16 %v149
    %v350 = vunpack.c.l.b16 %v150
    %v351 = vunpack.c.l.b16 %v151
    %v352 = vunpack.c.l.b16 %v152
    %v353 = vunpack.c.l.b16 %v153
    %v354 = vunpack.c.l.b16 %v154
    %v355 = vunpack.c.l.b16 %v155
    %v356 = vunpack.c.l.b16 %v156
    %v357 = vunpack.c.l.b16 %v157
    %v358 = vunpack.c.l.b16 %v158
    %v359 = vunpack.c.l.b16 %v159
    %v360 = vunpack.c.l.b16 %v160
    %v361 = vunpack.c.l.b16 %v161
    %v362 = vunpack.c.l.b16 %v162
    %v363 = vunpack.c.l.b16 %v163
    %v364 = vunpack.c.l.b16 %v164
    %v365 = vunpack.c.l.b16 %v165
    %v366 = vunpack.c.l.b16 %v166
    %v367 = vunpack.c.l.b16 %v167
    %v368 = vunpack.c.l.b16 %v168
    %v369 = vunpack.c.l.b16 %v169
    %v370 = vpack.c.b16 %v273, %v272
    %v371 = vpack.c.b16 %v275, %v274
    %v372 = vpack.c.b16 %v277, %v276
    %v373 = vpack.c.b16 %v279, %v278
    %v374 = vpack.c.b16 %v281, %v280
    %v375 = vpack.c.b16 %v283, %v282
    %v376 = vpack.c.b16 %v285, %v284
    %v377 = vpack.c.b16 %v287, %v286
    %v378 = vpack.c.b16 %v289, %v288
    %v379 = vpack.c.b16 %v291, %v290
    %v380 = vpack.c.b16 %v293, %v292
    %v381 = vpack.c.b16 %v295, %v294
    %v382 = vpack.c.b16 %v297, %v296
    %v383 = vpack.c.b16 %v299, %v298
    %v384 = vpack.c.b16 %v301, %v300
    %v385 = vpack.c.b16 %v303, %v302
    %v386 = vpack.c.b16 %v305, %v304
    %v387 = vpack.c.b16 %v307, %v306
    %v388 = vpack.c.b16 %v309, %v308
    %v389 = vpack.c.b16 %v311, %v310
    %v390 = vpack.c.b16 %v313, %v312
    %v391 = vpack.c.b16 %v315, %v314
    %v392 = vpack.c.b16 %v317, %v316
    %v393 = vpack.c.b16 %v319, %v318
    %v394 = vpack.c.b16 %v321, %v320
    %v395 = vpack.c.b16 %v323, %v322
    %v396 = vpack.c.b16 %v325, %v324
    %v397 = vpack.c.b16 %v327, %v326
    %v398 = vpack.c.b16 %v329, %v328
    %v399 = vpack.c.b16 %v331, %v330
    %v400 = vpack.c.b16 %v333, %v332
    %v401 = vpack.c.b16 %v335, %v334
    %v402 = vpack.c.b16 %v337, %v336
    %v403 = vpack.c.b16 %v339, %v338
    %v404 = vpack.c.b16 %v341, %v340
    %v405 = vpack.c.b16 %v343, %v342
    %v406 = vpack.c.b16 %v345, %v344
    %v407 = vpack.c.b16 %v347, %v346
    %v408 = vpack.c.b16 %v349, %v348
    %v409 = vpack.c.b16 %v351, %v350
    %v410 = vpack.c.b16 %v353, %v352
    %v411 = vpack.c.b16 %v355, %v354
    %v412 = vpack.c.b16 %v357, %v356
    %v413 = vpack.c.b16 %v359, %v358
    %v414 = vpack.c.b16 %v361, %v360
    %v415 = vpack.c.b16 %v363, %v362
    %v416 = vpack.c.b16 %v365, %v364
    %v417 = vpack.c.b16 %v367, %v366
    %v418 = vpack.c.b16 %v369, %v368
    %vm468 = vcmask 130048
    %v470 = vsel %vm468, %v71, 0
    %472 = vmatpush.bf16.msra.mxu0 %v377
    %473 = vmatpush.bf16.msra.mxu0 %v376
    %474 = vmatpush.bf16.msra.mxu0 %v375
    %475 = vmatpush.bf16.msra.mxu0 %v374
    %476 = vmatpush.bf16.msra.mxu0 %v373
    %477 = vmatpush.bf16.msra.mxu0 %v372
    %478 = vmatpush.bf16.msra.mxu0 %v371
    %479 = vmatpush.bf16.msra.mxu0 %v370
    %480 = vmatmul.bf16.gmra.mxu0 %v65
    %v481 = vpop.f32.mrf.mxu0
    %v482 = vadd.f32 %v172, %v481
    %v483 = vpop.f32.mrf.mxu0
    %v484 = vadd.f32 %v172, %v483
    %485 = vdwg.mxu0
    %486 = vmatpush.bf16.msra.mxu0 %v385
    %487 = vmatpush.bf16.msra.mxu0 %v384
    %488 = vmatpush.bf16.msra.mxu0 %v383
    %489 = vmatpush.bf16.msra.mxu0 %v382
    %490 = vmatpush.bf16.msra.mxu0 %v381
    %491 = vmatpush.bf16.msra.mxu0 %v380
    %492 = vmatpush.bf16.msra.mxu0 %v379
    %493 = vmatpush.bf16.msra.mxu0 %v378
    %494 = vmatmul.bf16.gmra.mxu0 %v66
    %v495 = vpop.f32.mrf.mxu0
    %v496 = vadd.f32 %v482, %v495
    %v497 = vpop.f32.mrf.mxu0
    %v498 = vadd.f32 %v484, %v497
    %499 = vdwg.mxu0
    %500 = vmatpush.bf16.msra.mxu0 %v393
    %501 = vmatpush.bf16.msra.mxu0 %v392
    %502 = vmatpush.bf16.msra.mxu0 %v391
    %503 = vmatpush.bf16.msra.mxu0 %v390
    %504 = vmatpush.bf16.msra.mxu0 %v389
    %505 = vmatpush.bf16.msra.mxu0 %v388
    %506 = vmatpush.bf16.msra.mxu0 %v387
    %507 = vmatpush.bf16.msra.mxu0 %v386
    %508 = vmatmul.bf16.gmra.mxu0 %v67
    %v509 = vpop.f32.mrf.mxu0
    %v510 = vadd.f32 %v496, %v509
    %v511 = vpop.f32.mrf.mxu0
    %v512 = vadd.f32 %v498, %v511
    %513 = vdwg.mxu0
    %514 = vmatpush.bf16.msra.mxu0 %v401
    %515 = vmatpush.bf16.msra.mxu0 %v400
    %516 = vmatpush.bf16.msra.mxu0 %v399
    %517 = vmatpush.bf16.msra.mxu0 %v398
    %518 = vmatpush.bf16.msra.mxu0 %v397
    %519 = vmatpush.bf16.msra.mxu0 %v396
    %520 = vmatpush.bf16.msra.mxu0 %v395
    %521 = vmatpush.bf16.msra.mxu0 %v394
    %522 = vmatmul.bf16.gmra.mxu0 %v68
    %v523 = vpop.f32.mrf.mxu0
    %v524 = vadd.f32 %v510, %v523
    %v525 = vpop.f32.mrf.mxu0
    %v526 = vadd.f32 %v512, %v525
    %527 = vdwg.mxu0
    %528 = vmatpush.bf16.msra.mxu0 %v409
    %529 = vmatpush.bf16.msra.mxu0 %v408
    %530 = vmatpush.bf16.msra.mxu0 %v407
    %531 = vmatpush.bf16.msra.mxu0 %v406
    %532 = vmatpush.bf16.msra.mxu0 %v405
    %533 = vmatpush.bf16.msra.mxu0 %v404
    %534 = vmatpush.bf16.msra.mxu0 %v403
    %535 = vmatpush.bf16.msra.mxu0 %v402
    %536 = vmatmul.bf16.gmra.mxu0 %v69
    %v537 = vpop.f32.mrf.mxu0
    %v538 = vadd.f32 %v524, %v537
    %v539 = vpop.f32.mrf.mxu0
    %v540 = vadd.f32 %v526, %v539
    %541 = vdwg.mxu0
    %542 = vmatpush.bf16.msra.mxu0 %v417
    %543 = vmatpush.bf16.msra.mxu0 %v416
    %544 = vmatpush.bf16.msra.mxu0 %v415
    %545 = vmatpush.bf16.msra.mxu0 %v414
    %546 = vmatpush.bf16.msra.mxu0 %v413
    %547 = vmatpush.bf16.msra.mxu0 %v412
    %548 = vmatpush.bf16.msra.mxu0 %v411
    %549 = vmatpush.bf16.msra.mxu0 %v410
    %550 = vmatmul.bf16.gmra.mxu0 %v70
    %v551 = vpop.f32.mrf.mxu0
    %v552 = vadd.f32 %v538, %v551
    %v553 = vpop.f32.mrf.mxu0
    %v554 = vadd.f32 %v540, %v553
    %555 = vdwg.mxu0
    %556 = vmatpush.bf16.msra.mxu0 0
    %557 = vmatpush.bf16.msra.mxu0 0
    %558 = vmatpush.bf16.msra.mxu0 0
    %559 = vmatpush.bf16.msra.mxu0 0
    %560 = vmatpush.bf16.msra.mxu0 0
    %561 = vmatpush.bf16.msra.mxu0 0
    %562 = vmatpush.bf16.msra.mxu0 0
    %563 = vmatpush.bf16.msra.mxu0 %v418
    %564 = vmatmul.bf16.gmra.mxu0 %v470
    %v565 = vpop.f32.mrf.mxu0
    %v566 = vadd.f32 %v552, %v565
    %v567 = vpop.f32.mrf.mxu0
    %v568 = vadd.f32 %v554, %v567
    %569 = vdwg.mxu0
    %v570 = vmax.f32 %v566, 0.0
    %v571 = vmax.f32 %v568, 0.0
    %v572 = vld [vmem:[%s3] sm:$0x1]
    %v574 = vperm.slane %v572, 0
    %v576 = vadd.f32 %v570, %v574
    %v577 = vadd.f32 %v571, %v574
    %578 = vmax.xlane.f32.xlu0 %v576
    %v579 = vpop.xlane.xlu0 %578
    %580 = vmax.xlane.f32.xlu0 %v577
    %v581 = vpop.xlane.xlu0 %580
    %v582 = vsub.f32 %v576, %v579
    %v583 = vsub.f32 %v577, %v581
    %v584 = vmul.f32 %v582, 1.442695
    %v585 = vpow.pop %v584
    %v586 = vmul.f32 %v583, 1.442695
    %v587 = vpow.pop %v586
    %588 = vadd.xlane.f32.xlu0 %v585
    %v589 = vpop.xlane.xlu0 %588
    %590 = vadd.xlane.f32.xlu0 %v587
    %v591 = vpop.xlane.xlu0 %590
    %v592 = vlog2.pop %v589
    %v593 = vmul.f32 %v592, 0.6931472
    %v594 = vlog2.pop %v591
    %v595 = vmul.f32 %v594, 0.6931472
    %v596 = vsub.f32 %v582, %v593
    %v597 = vsub.f32 %v583, %v595
    %598 = vst [vmem:[#allocation7] sm:$0xff] %v596
    %599 = vst [vmem:[#allocation7 + $0x8] sm:$0xff] %v597
    // Predicated region
    $region26: #{tpu_custom_call.1} parent=1 // pred_check
      _
    $region27: #{tpu_custom_call.1} parent=1 // pred_check_branch
      %601 = sbr.rel (0) target = $region29
    $region28: #{tpu_custom_call.1} parent=1 // pred_region
      %603 = vsyncadd [#allocation4], 0
      %s604 = sshll.u32 [#allocation7], 4
      %s605 = int_to_ptr.vmem [resolvable:$true] %s604
      %s606 = sshll.u32 %s4, 4
      %s607 = int_to_ptr.hbm [resolvable:$true] %s606
      %612 = dma.vmem_to_hbm [thread:$0]  %s605, 256, %s607, [#allocation4], 128, 128, 8
    $region29: #{tpu_custom_call.1} parent=1 // pred_fallthru
      _
    // Predicated region
    $region30: #{tpu_custom_call.1} parent=1 // pred_check
      _
    $region31: #{tpu_custom_call.1} parent=1 // pred_check_branch
      %614 = sbr.rel (0) target = $region33
    $region32: #{tpu_custom_call.1} parent=1 // pred_region
      %616 = dma.done [#allocation4], 256
    $region33: #{tpu_custom_call.1} parent=1 // pred_fallthru
      _
    %617 = vsyncpa [#allocation3], 1
    %618 = vsyncpa [#allocation6], 1
    %619 = vsyncpa [#allocation4], 1

</llo_original>
